<compile_context>
chip_gen: v6e
topology: v6e:2x2x1
jax: 0.10.0
libtpu: 0.0.40
codegen_flags: <defaults>
</compile_context>

<pallas_src>
import functools

import jax
import jax.numpy as jnp
from jax import lax
from jax.experimental import pallas as pl
from jax.experimental.pallas import tpu as pltpu


def _round_up(x, m):
    return ((x + m - 1) // m) * m


def _mmd_tile_kernel(zr_ref, zc_ref, wr_ref, wc_ref, out_ref, *,
                     n_kernels, mul_factor, ratios):
    """One (T, T) tile of the weighted multi-bandwidth kernel sum.

    zr_ref: (T, D_pad) augmented row slab   [zc_i, 1, a_i, 0...]
    zc_ref: (T, D_pad) augmented col slab   [2*inv*zc_j, -a_j, -1, 0...]
    wr_ref: (T, 1)  row weights (+1/n_x, -1/n_y, 0 on padding)
    wc_ref: (1, T)  col weights
    out_ref: (T, 1) per-row partial sums, accumulated across the col axis.
    """
    j = pl.program_id(1)

    @pl.when(j == 0)
    def _():
        out_ref[...] = jnp.zeros_like(out_ref)

    # MXU directly produces  arg_ij = 2*inv*<zc_i, zc_j> - a_i - a_j
    #                               = -||zc_i - zc_j||^2 / (bw * max_mult)
    # (last-dim contraction on both operands -> no transpose of the slabs).
    arg = lax.dot_general(
        zr_ref[...], zc_ref[...],
        dimension_numbers=(((1,), (1,)), ((), ())),
        preferred_element_type=jnp.float32)                 # (T, T)
    # Clamp tiny positive rounding noise (d2 must be >= 0).
    arg = jnp.minimum(arg, 0.0)
    base = jnp.exp(arg)                                      # widest-bandwidth kernel

    mf = float(mul_factor)
    if float(mf).is_integer() and mf >= 2.0:
        # Exact integer power chain: the other kernels are base ** (mf ** p),
        # produced with VPU multiplies only (one EUP exp total).
        m = int(mf)
        k_sum = base
        cur = base
        for _ in range(n_kernels - 1):
            nxt = cur
            for _ in range(m - 1):
                nxt = nxt * cur
            cur = nxt
            k_sum = k_sum + cur
    else:
        # General multipliers: one exp per kernel (EUP-bound; keep n_kernels
        # small on this path).
        k_sum = None
        for r in ratios:
            term = base if r == 1.0 else jnp.exp(arg * jnp.float32(r))
            k_sum = term if k_sum is None else k_sum + term

    # Weighted partial:  sum_j w_j K_ij  per row, then scale by w_i.
    row_part = jnp.sum(k_sum * wc_ref[...], axis=1, keepdims=True)   # (T, 1)
    out_ref[...] += row_part * wr_ref[...]


def mmd_loss(X, Y, *, n_kernels=3, mul_factor=2.0, bandwidth=None):
    """Pallas implementation of MMDLoss(kernel=RBF(n_kernels, mul_factor, bandwidth))."""
    X = jnp.asarray(X, jnp.float32)
    Y = jnp.asarray(Y, jnp.float32)
    n_x, n_y = X.shape[0], Y.shape[0]
    Z = jnp.concatenate([X, Y], axis=0)                      # (N, D)
    N, D = Z.shape

    # Center: pairwise distances are translation invariant; this makes the
    # analytic bandwidth sum numerically well conditioned.
    Zc = Z - jnp.mean(Z, axis=0, keepdims=True)
    sqn = jnp.sum(Zc * Zc, axis=1)                           # (N,)

    # Bandwidth (default: mean off-diagonal squared distance), O(N*D) up front:
    #   sum_ij ||zi - zj||^2 = 2N * sum_i ||zc_i||^2 - 2 * ||sum_i zc_i||^2
    if bandwidth is None:
        col = jnp.sum(Zc, axis=0)
        sum_d2 = 2.0 * N * jnp.sum(sqn) - 2.0 * jnp.sum(col * col)
        bw = sum_d2 / jnp.float32(N * N - N)
    else:
        bw = jnp.float32(bandwidth)

    # bandwidth_multipliers = mul_factor ** (arange(n_kernels) - n_kernels // 2)
    shift = n_kernels // 2
    mults = [float(mul_factor) ** (k - shift) for k in range(n_kernels)]
    max_mult = max(mults)
    ratios = tuple(max_mult / m for m in mults)              # >= 1, includes 1.0
    inv = 1.0 / (bw * jnp.float32(max_mult))                 # scalar

    # Augmented operands so the MXU emits the exponent argument directly:
    #   <[zc_i, 1, a_i], [2*inv*zc_j, -a_j, -1]> = -inv * ||zc_i - zc_j||^2
    a = (inv * sqn)[:, None]                                 # (N, 1)
    ones = jnp.ones((N, 1), jnp.float32)
    zr_aug = jnp.concatenate([Zc, ones, a], axis=1)          # (N, D+2)
    zc_aug = jnp.concatenate([(2.0 * inv) * Zc, -a, -ones], axis=1)

    # Tile / padding choices (MXU-friendly; keeps pad waste small for small N).
    if N <= 256:
        T = _round_up(max(N, 8), 8)
    elif N <= 1024:
        T = 128
    else:
        T = 256
    N_pad = _round_up(N, T)
    D_pad = _round_up(D + 2, 128)
    # TODO(synk): for very large feature dims (D_pad >> ~4096) add a third grid
    # axis blocking the contraction dimension in 256-chunks.

    def _pad2(x):
        return jnp.pad(x, ((0, N_pad - x.shape[0]), (0, D_pad - x.shape[1])))

    zr_p = _pad2(zr_aug)
    zc_p = _pad2(zc_aug)

    # Quadrant weights (+1/n_x for X rows, -1/n_y for Y rows, 0 for padding):
    # loss = sum_ij w_i w_j K_ij = mean(XX) - 2*mean(XY) + mean(YY).
    w = jnp.concatenate([jnp.full((n_x,), 1.0 / n_x, jnp.float32),
                         jnp.full((n_y,), -1.0 / n_y, jnp.float32)])
    w = jnp.pad(w, (0, N_pad - N))
    w_row = w[:, None]                                       # (N_pad, 1)
    w_col = w[None, :]                                       # (1, N_pad)

    # Generation-aware VMEM limit (v7x physical VMEM is 64 MiB).
    try:
        vmem_cap = pltpu.get_tpu_info().vmem_capacity_bytes
    except Exception:
        vmem_cap = 64 * 1024 * 1024
    vmem_limit = min(int(0.85 * vmem_cap), 64 * 1024 * 1024)

    grid = (N_pad // T, N_pad // T)
    kernel = functools.partial(_mmd_tile_kernel, n_kernels=n_kernels,
                               mul_factor=float(mul_factor), ratios=ratios)

    partials = pl.pallas_call(
        kernel,
        out_shape=jax.ShapeDtypeStruct((N_pad, 1), jnp.float32),
        grid_spec=pltpu.PrefetchScalarGridSpec(
            num_scalar_prefetch=0,
            grid=grid,
            in_specs=[
                pl.BlockSpec((T, D_pad), lambda i, j: (i, 0)),   # row slab
                pl.BlockSpec((T, D_pad), lambda i, j: (j, 0)),   # col slab
                pl.BlockSpec((T, 1), lambda i, j: (i, 0)),       # w_row
                pl.BlockSpec((1, T), lambda i, j: (0, j)),       # w_col
            ],
            out_specs=pl.BlockSpec((T, 1), lambda i, j: (i, 0)),
        ),
        compiler_params=pltpu.CompilerParams(
            dimension_semantics=("parallel", "arbitrary"),
            vmem_limit_bytes=vmem_limit),
    )(zr_p, zc_p, w_row, w_col)

    return jnp.sum(partials)


def _mmd_loss_ref(X, Y, *, n_kernels=3, mul_factor=2.0, bandwidth=None):
    """Plain-JAX reference mirroring the PyTorch module, for a sanity check."""
    n_x = X.shape[0]
    Z = jnp.concatenate([X, Y], axis=0).astype(jnp.float32)
    N = Z.shape[0]
    diff = Z[:, None, :] - Z[None, :, :]
    d2 = jnp.sum(diff * diff, axis=-1)
    bw = jnp.sum(d2) / (N * N - N) if bandwidth is None else jnp.float32(bandwidth)
    mults = (mul_factor ** (jnp.arange(n_kernels) - n_kernels // 2)).astype(jnp.float32)
    K = jnp.sum(jnp.exp(-d2[None, :, :] / (bw * mults)[:, None, None]), axis=0)
    xx = jnp.mean(K[:n_x, :n_x])
    xy = jnp.mean(K[:n_x, n_x:])
    yy = jnp.mean(K[n_x:, n_x:])
    return xx - 2.0 * xy + yy


if __name__ == "__main__":
    key = jax.random.PRNGKey(0)
    kx, ky = jax.random.split(key)
    # X, Y: [n_samples, features]
    X = jax.random.normal(kx, (8, 32), dtype=jnp.float32)
    Y = jax.random.normal(ky, (8, 32), dtype=jnp.float32) + 0.5

    loss = jax.block_until_ready(mmd_loss(X, Y))
    ref = jax.block_until_ready(_mmd_loss_ref(X, Y))
    assert jnp.allclose(loss, ref, rtol=1e-4, atol=1e-5), (loss, ref)
    print("KERNEL_OK")
</pallas_src>

<mosaic_0001>
module attributes {stable_mosaic.version = 11 : i64} {
  func.func @_mmd_tile_kernel(%arg0: i32, %arg1: i32, %arg2: memref<16x128xf32, #tpu.memory_space<vmem>>, %arg3: memref<16x128xf32, #tpu.memory_space<vmem>>, %arg4: memref<16x1xf32, #tpu.memory_space<vmem>>, %arg5: memref<1x16xf32, #tpu.memory_space<vmem>>, %arg6: memref<16x1xf32, #tpu.memory_space<vmem>>) attributes {dimension_semantics = [#tpu.dimension_semantics<parallel>, #tpu.dimension_semantics<arbitrary>], iteration_bounds = array<i64: 1, 1>, scalar_prefetch = 0 : i64, scratch_operands = 0 : i64, tpu.core_type = #tpu.core_type<tc>, window_params = [{transform_indices = @transform_0, window_bounds = array<i64: 16, 128>}, {transform_indices = @transform_1, window_bounds = array<i64: 16, 128>}, {transform_indices = @transform_2, window_bounds = array<i64: 16, 1>}, {transform_indices = @transform_3, window_bounds = array<i64: 1, 16>}, {transform_indices = @transform_4, window_bounds = array<i64: 16, 1>}]} {
    %c0_i32 = arith.constant 0 : i32
    %0 = arith.cmpi eq, %arg1, %c0_i32 : i32
    %1 = arith.extui %0 : i1 to i32
    %c0_i32_0 = arith.constant 0 : i32
    %2 = arith.cmpi ne, %1, %c0_i32_0 : i32
    scf.if %2 {
      %cst_14 = arith.constant 0.000000e+00 : f32
      %23 = vector.broadcast %cst_14 : f32 to vector<16x1xf32>
      %c0_15 = arith.constant 0 : index
      %c0_16 = arith.constant 0 : index
      %24 = vector.load %arg6[%c0_15, %c0_16] : memref<16x1xf32, #tpu.memory_space<vmem>>, vector<16x1xf32>
      tpu.vector_store %arg6[%c0_15, %c0_16], %23 {strides = array<i32>} : memref<16x1xf32, #tpu.memory_space<vmem>>, vector<16x1xf32>,
    } else {
    }
    %c0 = arith.constant 0 : index
    %c0_1 = arith.constant 0 : index
    %3 = vector.load %arg2[%c0, %c0_1] : memref<16x128xf32, #tpu.memory_space<vmem>>, vector<16x128xf32>
    %c0_2 = arith.constant 0 : index
    %c0_3 = arith.constant 0 : index
    %4 = vector.load %arg3[%c0_2, %c0_3] : memref<16x128xf32, #tpu.memory_space<vmem>>, vector<16x128xf32>
    %cst = arith.constant dense<0.000000e+00> : vector<16x16xf32>
    %5 = tpu.matmul %3, %4, %cst {dimension_numbers = #tpu.dot_dimension_numbers<[1], [1], [0], [0], [0, 0, 1, 0], [], []>} : vector<16x128xf32>, vector<16x128xf32>, vector<16x16xf32> -> vector<16x16xf32>
    %cst_4 = arith.constant 0.000000e+00 : f32
    %6 = vector.broadcast %cst_4 : f32 to vector<16x16xf32>
    %7 = arith.minimumf %5, %6 : vector<16x16xf32>
    %8 = math.exp %7 : vector<16x16xf32>
    %9 = arith.mulf %8, %8 : vector<16x16xf32>
    %10 = arith.addf %8, %9 : vector<16x16xf32>
    %11 = arith.mulf %9, %9 : vector<16x16xf32>
    %12 = arith.addf %10, %11 : vector<16x16xf32>
    %c0_5 = arith.constant 0 : index
    %c0_6 = arith.constant 0 : index
    %13 = vector.load %arg5[%c0_5, %c0_6] : memref<1x16xf32, #tpu.memory_space<vmem>>, vector<1x16xf32>
    %14 = vector.broadcast %13 : vector<1x16xf32> to vector<16x16xf32>
    %15 = arith.mulf %12, %14 : vector<16x16xf32>
    %cst_7 = arith.constant dense<0.000000e+00> : vector<16xf32>
    %16 = vector.multi_reduction <add>, %15, %cst_7 [1] : vector<16x16xf32> to vector<16xf32>
    %17 = vector.shape_cast %16 : vector<16xf32> to vector<16x1xf32>
    %c0_8 = arith.constant 0 : index
    %c0_9 = arith.constant 0 : index
    %18 = vector.load %arg6[%c0_8, %c0_9] : memref<16x1xf32, #tpu.memory_space<vmem>>, vector<16x1xf32>
    %c0_10 = arith.constant 0 : index
    %c0_11 = arith.constant 0 : index
    %19 = vector.load %arg4[%c0_10, %c0_11] : memref<16x1xf32, #tpu.memory_space<vmem>>, vector<16x1xf32>
    %20 = arith.mulf %17, %19 : vector<16x1xf32>
    %21 = arith.addf %18, %20 : vector<16x1xf32>
    %c0_12 = arith.constant 0 : index
    %c0_13 = arith.constant 0 : index
    %22 = vector.load %arg6[%c0_12, %c0_13] : memref<16x1xf32, #tpu.memory_space<vmem>>, vector<16x1xf32>
    tpu.vector_store %arg6[%c0_12, %c0_13], %21 {strides = array<i32>} : memref<16x1xf32, #tpu.memory_space<vmem>>, vector<16x1xf32>,
    return
  }
  func.func @transform_0(%arg0: i32, %arg1: i32) -> (i32, i32) {
    %c0_i32 = arith.constant 0 : i32
    %c0_i32_0 = arith.constant 0 : i32
    return %arg0, %c0_i32 : i32, i32
  }
  func.func @transform_1(%arg0: i32, %arg1: i32) -> (i32, i32) {
    %c0_i32 = arith.constant 0 : i32
    %c0_i32_0 = arith.constant 0 : i32
    return %arg1, %c0_i32 : i32, i32
  }
  func.func @transform_2(%arg0: i32, %arg1: i32) -> (i32, i32) {
    %c0_i32 = arith.constant 0 : i32
    %c0_i32_0 = arith.constant 0 : i32
    return %arg0, %c0_i32 : i32, i32
  }
  func.func @transform_3(%arg0: i32, %arg1: i32) -> (i32, i32) {
    %c0_i32 = arith.constant 0 : i32
    %c0_i32_0 = arith.constant 0 : i32
    return %c0_i32, %arg1 : i32, i32
  }
  func.func @transform_4(%arg0: i32, %arg1: i32) -> (i32, i32) {
    %c0_i32 = arith.constant 0 : i32
    %c0_i32_0 = arith.constant 0 : i32
    return %arg0, %c0_i32 : i32, i32
  }
}

</mosaic_0001>

<llo_original>
// kernel: tpu_custom_call.1
$region0: #{tpu_custom_call.1}
  #allocation0 [shape = 'u32[]', space=smem, size = 0x4, offset = 0x4, fixed_abs, tag = 'smem constant byte address 0x4 - core index']
  #allocation1 [shape = 'u32[144,128]{1,0:T(1,128)}', space=vmem, size = 0x12000, scoped, tag = 'internal scratch']
  %s0 = inlined_call_operand.vmem [shape: f32[16,128], index: 0, kind: input, shape index: {}]
  %s1 = inlined_call_operand.hbm [shape: f32[16,128], index: 1, kind: input, shape index: {}]
  %s2 = inlined_call_operand.vmem [shape: f32[16,1], index: 2, kind: input, shape index: {}]
  %s3 = inlined_call_operand.vmem [shape: f32[1,16], index: 3, kind: input, shape index: {}]
  %s4 = inlined_call_operand.vmem [shape: f32[16,1], index: 4, kind: output, shape index: {}]
  %s5 = sld [smem:[#allocation0]]
  $region34: #{tpu_custom_call.1} parent=0
    _
  %s7 = ssub.s32 1, %s5
  %s8 = scalar_select 0, %s7, %s5
  $region1: #{tpu_custom_call.1} parent=0
    #allocation2 [shape = 'u8[8192]{0}', space=vmem, size = 0x2000, scoped, tag = 'input window, operand 1, single buffered']
    #allocation3 [shape = 's32[1]{0}', space=sflag, size = 0x4, scoped, tag = 'scoped memory for tpu_custom_call.1']
    %9 = vsyncpa [#allocation3], 0
    // Predicated region
    $region2: #{tpu_custom_call.1} parent=1 // pred_check
      _
    $region3: #{tpu_custom_call.1} parent=1 // pred_check_branch
      %11 = sbr.rel (0) target = $region5
    $region4: #{tpu_custom_call.1} parent=1 // pred_region
      _
    $region5: #{tpu_custom_call.1} parent=1 // pred_fallthru
      _
    // Predicated region
    $region6: #{tpu_custom_call.1} parent=1 // pred_check
      _
    $region7: #{tpu_custom_call.1} parent=1 // pred_check_branch
      %13 = sbr.rel (0) target = $region9
    $region8: #{tpu_custom_call.1} parent=1 // pred_region
      %s15 = ssub.s32 256, 256
      %16 = vsyncadd [#allocation3], %s15
      %s17 = sshll.u32 [#allocation2], 4
      %s18 = int_to_ptr.vmem [resolvable:$true] %s17
      %23 = dma.hbm_to_vmem [thread:$0]  %s1, 256, %s18, [#allocation3], 128, 128, 8
    $region9: #{tpu_custom_call.1} parent=1 // pred_fallthru
      _
    // Predicated region
    $region10: #{tpu_custom_call.1} parent=1 // pred_check
      _
    $region11: #{tpu_custom_call.1} parent=1 // pred_check_branch
      %25 = sbr.rel (0) target = $region13
    $region12: #{tpu_custom_call.1} parent=1 // pred_region
      _
    $region13: #{tpu_custom_call.1} parent=1 // pred_fallthru
      _
    // Predicated region
    $region14: #{tpu_custom_call.1} parent=1 // pred_check
      _
    $region15: #{tpu_custom_call.1} parent=1 // pred_check_branch
      %27 = sbr.rel (0) target = $region17
    $region16: #{tpu_custom_call.1} parent=1 // pred_region
      _
    $region17: #{tpu_custom_call.1} parent=1 // pred_fallthru
      _
    // Predicated region
    $region18: #{tpu_custom_call.1} parent=1 // pred_check
      _
    $region19: #{tpu_custom_call.1} parent=1 // pred_check_branch
      %29 = sbr.rel (0) target = $region21
    $region20: #{tpu_custom_call.1} parent=1 // pred_region
      %30 = dma.done [#allocation3], 256
    $region21: #{tpu_custom_call.1} parent=1 // pred_fallthru
      _
    %p31 = scmp.eq.s32.totalorder 0, 0
    // Predicated region
    $region22: #{tpu_custom_call.1} parent=1 // pred_check
      %p32 = pneg %p31
    $region23: #{tpu_custom_call.1} parent=1 // pred_check_branch
      %34 = sbr.rel (%p32) target = $region25
    $region24: #{tpu_custom_call.1} parent=1 // pred_region
      %vm35 = vcmask 7168
      %36 = vst.msk [vmem:[%s4] sm:$0xff] %vm35, 0.0
      %37 = vst.msk [vmem:[%s4 + $0x8] sm:$0xff] %vm35, 0.0
    $region25: #{tpu_custom_call.1} parent=1 // pred_fallthru
      _
    %v38 = vld [vmem:[%s0] sm:$0xff]
    %v39 = vld [vmem:[%s0 + $0x8] sm:$0xff]
    %v40 = vld [vmem:[#allocation2] sm:$0xff]
    %v41 = vld [vmem:[#allocation2 + $0x8] sm:$0xff]
    %42 = vmatprep.subr.mxu0 0.0
    %43 = vmatpush1.xpose.msra.mxu0 0.0
    %44 = vmatprep.subr.mxu0 0.0
    %45 = vmatpush1.xpose.msra.mxu0 0.0
    %46 = vmatprep.subr.mxu0 0.0
    %47 = vmatpush1.xpose.msra.mxu0 0.0
    %48 = vmatprep.subr.mxu0 0.0
    %49 = vmatpush1.xpose.msra.mxu0 0.0
    %50 = vmatprep.subr.mxu0 0.0
    %51 = vmatpush1.xpose.msra.mxu0 0.0
    %52 = vmatprep.subr.mxu0 0.0
    %53 = vmatpush1.xpose.msra.mxu0 0.0
    %54 = vmatprep.subr.mxu0 0.0
    %55 = vmatpush1.xpose.msra.mxu0 0.0
    %56 = vmatprep.subr.mxu0 0.0
    %57 = vmatpush1.xpose.msra.mxu0 0.0
    %58 = vmatprep.subr.mxu0 0.0
    %59 = vmatpush1.xpose.msra.mxu0 0.0
    %60 = vmatprep.subr.mxu0 0.0
    %61 = vmatpush1.xpose.msra.mxu0 0.0
    %62 = vmatprep.subr.mxu0 0.0
    %63 = vmatpush1.xpose.msra.mxu0 0.0
    %64 = vmatprep.subr.mxu0 0.0
    %65 = vmatpush1.xpose.msra.mxu0 0.0
    %66 = vmatprep.subr.mxu0 0.0
    %67 = vmatpush1.xpose.msra.mxu0 0.0
    %68 = vmatprep.subr.mxu0 0.0
    %69 = vmatpush1.xpose.msra.mxu0 0.0
    %70 = vmatprep.subr.mxu0 0.0
    %71 = vmatpush1.xpose.msra.mxu0 %v41
    %72 = vmatprep.subr.mxu0 0.0
    %73 = vmatpush1.xpose.msra.mxu0 %v40
    %74 = vmatprep.subr.mxu0 0.0
    %75 = vmatpush2.xpose.msra.mxu0 0.0
    %76 = vmatprep.subr.mxu0 0.0
    %77 = vmatpush2.xpose.msra.mxu0 0.0
    %78 = vmatprep.subr.mxu0 0.0
    %79 = vmatpush2.xpose.msra.mxu0 0.0
    %80 = vmatprep.subr.mxu0 0.0
    %81 = vmatpush2.xpose.msra.mxu0 0.0
    %82 = vmatprep.subr.mxu0 0.0
    %83 = vmatpush2.xpose.msra.mxu0 0.0
    %84 = vmatprep.subr.mxu0 0.0
    %85 = vmatpush2.xpose.msra.mxu0 0.0
    %86 = vmatprep.subr.mxu0 0.0
    %87 = vmatpush2.xpose.msra.mxu0 0.0
    %88 = vmatprep.subr.mxu0 0.0
    %89 = vmatpush2.xpose.msra.mxu0 0.0
    %90 = vmatprep.subr.mxu0 0.0
    %91 = vmatpush2.xpose.msra.mxu0 0.0
    %92 = vmatprep.subr.mxu0 0.0
    %93 = vmatpush2.xpose.msra.mxu0 0.0
    %94 = vmatprep.subr.mxu0 0.0
    %95 = vmatpush2.xpose.msra.mxu0 0.0
    %96 = vmatprep.subr.mxu0 0.0
    %97 = vmatpush2.xpose.msra.mxu0 0.0
    %98 = vmatprep.subr.mxu0 0.0
    %99 = vmatpush2.xpose.msra.mxu0 0.0
    %100 = vmatprep.subr.mxu0 0.0
    %101 = vmatpush2.xpose.msra.mxu0 0.0
    %102 = vmatprep.subr.mxu0 0.0
    %103 = vmatpush2.xpose.msra.mxu0 0.0
    %104 = vmatprep.subr.mxu0 0.0
    %105 = vmatpush2.xpose.msra.mxu0 0.0
    %106 = vmatprep.mubr.f32.mxu0 0.0
    %107 = vmatmul.mubr.f32.gmra.mxu0 %v38
    %v108 = vpop.f32.mrf.mxu0
    %v109 = vadd.f32 0.0, %v108
    %v110 = vpop.f32.mrf.mxu0
    %111 = vmatprep.mubr.f32.mxu0 0.0
    %112 = vmatmul.mubr.f32.gmra.mxu0 %v39
    %v113 = vpop.f32.mrf.mxu0
    %v114 = vadd.f32 0.0, %v113
    %v115 = vpop.f32.mrf.mxu0
    %116 = vdwg.mxu0
    %v117 = vmin.f32 %v109, 0.0
    %v118 = vmin.f32 %v114, 0.0
    %v119 = vmul.f32 %v117, 1.442695
    %v120 = vpow.pop %v119
    %v121 = vmul.f32 %v118, 1.442695
    %v122 = vpow.pop %v121
    %v123 = vmul.f32 %v120, %v120
    %v124 = vmul.f32 %v122, %v122
    %v125 = vadd.f32 %v120, %v123
    %v126 = vadd.f32 %v122, %v124
    %v127 = vmul.f32 %v123, %v123
    %v128 = vmul.f32 %v124, %v124
    %v129 = vadd.f32 %v125, %v127
    %v130 = vadd.f32 %v126, %v128
    %v131 = vld [vmem:[%s3] sm:$0x1]
    %v133 = vlaneseq
    %v134 = vshrl.u32 %v133, 7
    %v135 = vsub.s32 0, %v134
    %v136 = vrot.slane %v131, %v135
    %v138 = vmul.f32 %v129, %v136
    %v139 = vmul.f32 %v130, %v136
    %vm140 = vcmask 130048
    %v141 = vsel %vm140, %v138, 0.0
    %142 = vadd.xlane.f32.xlu0 %v141
    %v143 = vpop.xlane.xlu0 %142
    %v144 = vsel %vm140, %v139, 0.0
    %145 = vadd.xlane.f32.xlu0 %v144
    %v146 = vpop.xlane.xlu0 %145
    %v147 = vld [vmem:[%s4] sm:$0xff]
    %v148 = vld [vmem:[%s4 + $0x8] sm:$0xff]
    %v149 = vld [vmem:[%s2] sm:$0xff]
    %v150 = vld [vmem:[%s2 + $0x8] sm:$0xff]
    %v151 = vmul.f32 %v143, %v149
    %v152 = vmul.f32 %v146, %v150
    %v153 = vadd.f32 %v147, %v151
    %v154 = vadd.f32 %v148, %v152
    %vm155 = vcmask 7168
    %156 = vst.msk [vmem:[%s4] sm:$0xff] %vm155, %v153
    %157 = vst.msk [vmem:[%s4 + $0x8] sm:$0xff] %vm155, %v154
    // Predicated region
    $region26: #{tpu_custom_call.1} parent=1 // pred_check
      _
    $region27: #{tpu_custom_call.1} parent=1 // pred_check_branch
      %159 = sbr.rel (0) target = $region29
    $region28: #{tpu_custom_call.1} parent=1 // pred_region
      _
    $region29: #{tpu_custom_call.1} parent=1 // pred_fallthru
      _
    // Predicated region
    $region30: #{tpu_custom_call.1} parent=1 // pred_check
      _
    $region31: #{tpu_custom_call.1} parent=1 // pred_check_branch
      %161 = sbr.rel (0) target = $region33
    $region32: #{tpu_custom_call.1} parent=1 // pred_region
      _
    $region33: #{tpu_custom_call.1} parent=1 // pred_fallthru
      _
    %162 = vsyncpa [#allocation3], 1

</llo_original>
